<compile_context>
chip_gen: v6e
topology: v6e:2x2x1
jax: 0.10.0
libtpu: 0.0.40
codegen_flags: <defaults>
</compile_context>

<pallas_src>
import jax
import jax.numpy as jnp
import numpy as np
from jax.experimental import pallas as pl
from jax.experimental.pallas import tpu as pltpu


# ----------------------------------------------------------------------------
# Kernel body: plain VMEM tile copy (the copy is purely HBM-bandwidth bound,
# so the body stays empty of compute).
# ----------------------------------------------------------------------------
def _copy_kernel(src_ref, dst_ref):
    dst_ref[...] = src_ref[...]


_LANE = 128
_TARGET_BLOCK_BYTES = 1 << 20  # ~1 MiB per block: ~85-86% of HBM roofline,
                               # 4 MiB resident with in/out double-buffering
                               # -> safe for v5e/v6e/v7x scoped VMEM defaults.


def _sublane_multiple(dtype):
    itemsize = jnp.dtype(dtype).itemsize
    return {4: 8, 2: 16, 1: 32}.get(itemsize, 8)


def _pick_lane_dim(total):
    # Largest multiple of 128 (capped at 2048) dividing the flat size; wider
    # rows -> fewer, larger contiguous DMA descriptors.
    for cand in (2048, 1024, 512, 256, 128):
        if total % cand == 0:
            return cand
    return None  # needs padding to a multiple of (sublane * 128)


def base_detector_forward(adv_images, targets=None):
    """Forward pass of BaseDetector: returns the adversarial images.

    Produces a fresh output buffer via a lane-dense, tiled Pallas copy.
    If aliasing the input is acceptable, callers can skip this and return
    `adv_images` directly (true zero-copy, no kernel launch).
    """
    del targets  # interface parity only; unused by the base-class forward

    orig_shape = adv_images.shape
    dtype = adv_images.dtype
    itemsize = jnp.dtype(dtype).itemsize
    sub = _sublane_multiple(dtype)
    total = int(np.prod(orig_shape)) if orig_shape else 1

    flat = adv_images.reshape(-1)
    lane_dim = _pick_lane_dim(total)
    if lane_dim is None:
        # Pad up to a multiple of (sublane * 128): keeps stores unmasked and
        # the grid fully pipelined; padding is sliced off afterwards.
        lane_dim = _LANE
        chunk = sub * _LANE
        padded = ((total + chunk - 1) // chunk) * chunk
        flat = jnp.pad(flat, (0, padded - total))
    else:
        padded = total

    rows = padded // lane_dim
    flat2d = flat.reshape(rows, lane_dim)

    # Fixed, dtype-aware block size targeting ~1 MiB; cdiv grid handles any
    # ragged last block (no exact-divisor requirement, no whole-array blocks).
    block_rows = max(sub, (_TARGET_BLOCK_BYTES // (lane_dim * itemsize)) // sub * sub)
    if block_rows >= rows:
        block_rows = rows  # single block equal to the full dim (always legal)
    grid = (pl.cdiv(rows, block_rows),)

    out2d = pl.pallas_call(
        _copy_kernel,
        out_shape=jax.ShapeDtypeStruct((rows, lane_dim), dtype),
        grid=grid,
        in_specs=[pl.BlockSpec((block_rows, lane_dim), lambda i: (i, 0))],
        out_specs=pl.BlockSpec((block_rows, lane_dim), lambda i: (i, 0)),
        compiler_params=pltpu.CompilerParams(
            # Lets v7x shard the grid across its two TensorCores; harmless on
            # single-TC v5e/v6e.  Copy stays HBM-bound either way.
            dimension_semantics=("parallel",),
            # Explicit headroom; well under v7x's 64 MiB physical VMEM.
            vmem_limit_bytes=32 * 1024 * 1024,
        ),
    )(flat2d)

    out_flat = out2d.reshape(-1)
    if padded != total:
        out_flat = out_flat[:total]
    return out_flat.reshape(orig_shape)


if __name__ == "__main__":
    key = jax.random.PRNGKey(0)
    k_img, k_tgt, k_img2 = jax.random.split(key, 3)

    # Small shapes consistent with an image-detection forward pass.
    shape = (2, 4, 16, 16)
    adv_images = jax.random.uniform(k_img, shape, dtype=jnp.float32)
    # Dummy targets (e.g. box coords) — accepted by forward but unused.
    targets = jax.random.uniform(k_tgt, (2, 4), dtype=jnp.float32)

    fwd = jax.jit(base_detector_forward)
    out = jax.block_until_ready(fwd(adv_images, targets))
    assert out.shape == shape
    assert out.dtype == jnp.float32
    assert np.array_equal(np.asarray(out), np.asarray(adv_images))

    # Non-128-divisible flat size: exercises the pad-then-slice path.
    shape2 = (2, 3, 5, 7)
    adv_images2 = jax.random.uniform(k_img2, shape2, dtype=jnp.float32)
    out2 = jax.block_until_ready(base_detector_forward(adv_images2, targets))
    assert out2.shape == shape2
    assert np.array_equal(np.asarray(out2), np.asarray(adv_images2))

    # bf16: exercises the dtype-aware sublane / block sizing.
    adv_images3 = adv_images.astype(jnp.bfloat16)
    out3 = jax.block_until_ready(base_detector_forward(adv_images3, targets))
    assert out3.shape == shape
    assert out3.dtype == jnp.bfloat16
    assert np.array_equal(np.asarray(out3), np.asarray(adv_images3))

    print("KERNEL_OK")
</pallas_src>

<mosaic_0001>
module attributes {stable_mosaic.version = 11 : i64} {
  func.func @_copy_kernel(%arg0: i32, %arg1: memref<1x2048xf32, #tpu.memory_space<vmem>>, %arg2: memref<1x2048xf32, #tpu.memory_space<vmem>>) attributes {dimension_semantics = [#tpu.dimension_semantics<parallel>], iteration_bounds = array<i64: 1>, scalar_prefetch = 0 : i64, scratch_operands = 0 : i64, tpu.core_type = #tpu.core_type<tc>, window_params = [{transform_indices = @transform_0, window_bounds = array<i64: 1, 2048>}, {transform_indices = @transform_1, window_bounds = array<i64: 1, 2048>}]} {
    %c0 = arith.constant 0 : index
    %c0_0 = arith.constant 0 : index
    %0 = vector.load %arg1[%c0, %c0_0] : memref<1x2048xf32, #tpu.memory_space<vmem>>, vector<1x2048xf32>
    %c0_1 = arith.constant 0 : index
    %c0_2 = arith.constant 0 : index
    %1 = vector.load %arg2[%c0_1, %c0_2] : memref<1x2048xf32, #tpu.memory_space<vmem>>, vector<1x2048xf32>
    tpu.vector_store %arg2[%c0_1, %c0_2], %0 {strides = array<i32>} : memref<1x2048xf32, #tpu.memory_space<vmem>>, vector<1x2048xf32>,
    return
  }
  func.func @transform_0(%arg0: i32) -> (i32, i32) {
    %c0_i32 = arith.constant 0 : i32
    %c0_i32_0 = arith.constant 0 : i32
    return %arg0, %c0_i32 : i32, i32
  }
  func.func @transform_1(%arg0: i32) -> (i32, i32) {
    %c0_i32 = arith.constant 0 : i32
    %c0_i32_0 = arith.constant 0 : i32
    return %arg0, %c0_i32 : i32, i32
  }
}

</mosaic_0001>

<llo_original>
// kernel: base_detector_forward.1
$region0: #{base_detector_forward.1}
  #allocation0 [shape = 'u32[]', space=smem, size = 0x4, offset = 0x4, fixed_abs, tag = 'smem constant byte address 0x4 - core index']
  #allocation1 [shape = 'u32[144,128]{1,0:T(1,128)}', space=vmem, size = 0x12000, scoped, tag = 'internal scratch']
  %s0 = inlined_call_operand.vmem [shape: f32[1,2048], index: 0, kind: input, shape index: {}]
  %s1 = inlined_call_operand.vmem [shape: f32[1,2048], index: 1, kind: output, shape index: {}]
  %s2 = sld [smem:[#allocation0]]
  $region14: #{base_detector_forward.1} parent=0
    _
  %s4 = ssub.s32 1, %s2
  %s5 = scalar_select 0, %s4, %s2
  // Predicated region
  $region2: #{base_detector_forward.1} parent=0 // pred_check
    _
  $region3: #{base_detector_forward.1} parent=0 // pred_check_branch
    %7 = sbr.rel (0) target = $region5
  $region4: #{base_detector_forward.1} parent=0 // pred_region
    _
  $region5: #{base_detector_forward.1} parent=0 // pred_fallthru
    _
  %v8 = vld [vmem:[%s0] sm:$0xff]
  %v9 = vld [vmem:[%s0 + $0x8] sm:$0xff]
  %10 = vst [vmem:[%s1] sm:$0xff] %v8
  %11 = vst [vmem:[%s1 + $0x8] sm:$0xff] %v9
  // Predicated region
  $region6: #{base_detector_forward.1} parent=0 // pred_check
    _
  $region7: #{base_detector_forward.1} parent=0 // pred_check_branch
    %13 = sbr.rel (0) target = $region9
  $region8: #{base_detector_forward.1} parent=0 // pred_region
    _
  $region9: #{base_detector_forward.1} parent=0 // pred_fallthru
    _
  // Predicated region
  $region10: #{base_detector_forward.1} parent=0 // pred_check
    _
  $region11: #{base_detector_forward.1} parent=0 // pred_check_branch
    %15 = sbr.rel (0) target = $region13
  $region12: #{base_detector_forward.1} parent=0 // pred_region
    _
  $region13: #{base_detector_forward.1} parent=0 // pred_fallthru
    _

</llo_original>
